<compile_context>
chip_gen: v7x
topology: tpu7x:2x2x1
jax: 0.10.0
libtpu: 0.0.40
codegen_flags: <defaults>
</compile_context>

<pallas_src>
from functools import partial

import jax
import jax.numpy as jnp
from jax import lax
from jax.experimental import pallas as pl
from jax.experimental.pallas import tpu as pltpu


def _round_up(v, m):
    return -(-v // m) * m


def _vmem_capacity_bytes():
    # Per-TensorCore VMEM capacity; fall back to the smallest across
    # generations (v7x: 64 MiB physical) if the query is unavailable.
    try:
        cap = int(pltpu.get_tpu_info().vmem_capacity_bytes)
        return min(max(cap, 32 * 1024 * 1024), 128 * 1024 * 1024)
    except Exception:
        return 64 * 1024 * 1024


def _cosine_scores_kernel(x_ref, chat_ref, scores_ref, *, bf16_fast_path):
    """scores_i = (c_hat . x_i) / max(||x_i||, eps), emitted lane-dense (1, TB)."""
    chat = chat_ref[...]                                   # (1, D) f32, unit-norm
    dn = (((1,), (1,)), ((), ()))                          # contract over D

    if bf16_fast_path:
        # bf16 inputs: no f32 upcast, DEFAULT-precision MXU (native rate, no
        # bf16x3 decomposition temporaries over the big tile).  f32 epilogue.
        xb = x_ref[...]                                    # (TB, D) bf16
        dots = lax.dot_general(chat.astype(jnp.bfloat16), xb, dn,
                               preferred_element_type=jnp.float32)   # (1, TB)
        xsq = lax.dot_general(jnp.ones(chat.shape, jnp.bfloat16), xb * xb, dn,
                              preferred_element_type=jnp.float32)    # (1, TB)
    else:
        xf = x_ref[...].astype(jnp.float32)                # (TB, D)
        # HIGHEST keeps f32 parity with the PyTorch reference; the hi/lo
        # decomposition temps are accounted for in the wrapper's VMEM budget.
        dots = lax.dot_general(chat, xf, dn,
                               precision=lax.Precision.HIGHEST,
                               preferred_element_type=jnp.float32)   # c . x_i
        xsq = lax.dot_general(jnp.ones_like(chat), xf * xf, dn,
                              precision=lax.Precision.HIGHEST,
                              preferred_element_type=jnp.float32)    # ||x_i||^2

    eps = 1e-12                                            # F.normalize eps
    scores_ref[...] = dots / jnp.maximum(jnp.sqrt(xsq), eps)


def angular_iso_loss(x, labels, center, m_real=0.5, m_fake=0.2, alpha=20.0):
    """Pallas implementation of AngularIsoLoss.forward.

    Args:
      x:      (B, D) feature matrix (f32 or bf16; bf16 takes the fast MXU path).
      labels: (B,)   int labels (0 = real, 1 = fake).
      center: (1, D) learned center parameter.

    Returns:
      (scalar loss, cosine scores of shape (B,))
    """
    B, D = x.shape
    itemsize = jnp.dtype(x.dtype).itemsize
    bf16_fast_path = x.dtype == jnp.bfloat16

    # ---- tile sizing from a VMEM accounting formula -------------------------
    # footprint ~= 2 (double buffer) * tb*D*itemsize          (streamed input)
    #            + per-row intermediates:
    #                bf16 path : x*x product (+ margin)        ~  4*D bytes
    #                f32 path  : upcast + x*x + HIGHEST hi/lo  ~ 16*D bytes
    per_row = 2 * D * itemsize + (4 * D if bf16_fast_path else 16 * D)
    vmem_budget = (_vmem_capacity_bytes() * 3) // 4        # <= ~48 MiB on v7x
    tb = max(128, min(4096, (vmem_budget // per_row) // 128 * 128))
    # Ensure >= 2 grid steps for big batches so both v7x TensorCores get work
    # under the "parallel" axis (each tile still >= 1024 rows).
    if B >= 2048:
        tb = min(tb, max(1024, _round_up(-(-B // 2), 128)))
    if B <= tb:
        tb = _round_up(B, 8)                               # single, sublane-aligned tile
    b_pad = _round_up(B, tb)
    num_tiles = b_pad // tb
    vmem_limit = int(min(max(vmem_budget, per_row * tb + (4 << 20)),
                         128 * 1024 * 1024))

    # Center normalization is grid-invariant -> hoist out of the kernel.
    eps = 1e-12
    c = center.astype(jnp.float32).reshape(1, D)
    c_hat = c / jnp.maximum(jnp.sqrt(jnp.sum(c * c, axis=1, keepdims=True)), eps)

    x_in = x if b_pad == B else jnp.pad(x, ((0, b_pad - B), (0, 0)))

    kernel = partial(_cosine_scores_kernel, bf16_fast_path=bf16_fast_path)

    cost = pl.CostEstimate(
        flops=int(5 * b_pad * D),
        transcendentals=int(b_pad),
        bytes_accessed=int(b_pad * D * itemsize + D * 4 + b_pad * 4),
    )

    scores_row = pl.pallas_call(
        kernel,
        out_shape=jax.ShapeDtypeStruct((1, b_pad), jnp.float32),   # lane-dense
        grid=(num_tiles,),
        in_specs=[
            pl.BlockSpec((tb, D), lambda i: (i, 0)),       # x tile (streamed)
            pl.BlockSpec((1, D), lambda i: (0, 0)),        # c_hat, stays resident
        ],
        out_specs=pl.BlockSpec((1, tb), lambda i: (0, i)),
        compiler_params=pltpu.CompilerParams(
            dimension_semantics=("parallel",),             # independent tiles -> megacore
            vmem_limit_bytes=vmem_limit,
        ),
        cost_estimate=cost,
    )(x_in, c_hat)

    scores = scores_row[0, :B]

    # O(B) finalize in plain JAX (per perf review): softplus + per-class means.
    labels = labels.astype(jnp.int32)
    is_real = labels == 0
    is_fake = labels == 1
    sp_real = jax.nn.softplus(alpha * (m_real - scores))
    sp_fake = jax.nn.softplus(alpha * (scores - m_fake))
    # TODO(synk): like the PyTorch module, a batch missing one class yields NaN
    # (mean over an empty set); clamp the counts if that must be guarded.
    loss = (jnp.sum(jnp.where(is_real, sp_real, 0.0)) / jnp.sum(is_real)
            + jnp.sum(jnp.where(is_fake, sp_fake, 0.0)) / jnp.sum(is_fake))
    return loss, scores


def _reference(x, labels, center, m_real=0.5, m_fake=0.2, alpha=20.0):
    # Pure-JAX reference mirroring the PyTorch module's forward (f32 math).
    eps = 1e-12
    xf = x.astype(jnp.float32)
    c = center.astype(jnp.float32)
    w = c / jnp.maximum(jnp.sqrt(jnp.sum(c * c, axis=1, keepdims=True)), eps)
    xn = xf / jnp.maximum(jnp.sqrt(jnp.sum(xf * xf, axis=1, keepdims=True)), eps)
    scores = jnp.sum(xn * w, axis=1)
    loss = (jnp.mean(jax.nn.softplus(alpha * (m_real - scores)),
                     where=(labels == 0))
            + jnp.mean(jax.nn.softplus(alpha * (scores - m_fake)),
                       where=(labels == 1)))
    return loss, scores


if __name__ == "__main__":
    key = jax.random.PRNGKey(0)
    k_x, k_c = jax.random.split(key)

    B, D = 16, 256
    m_real, m_fake, alpha = 0.5, 0.2, 20.0

    x = jax.random.normal(k_x, (B, D), dtype=jnp.float32)
    center = jax.random.normal(k_c, (1, D), dtype=jnp.float32)
    labels = jnp.array([0, 1] * (B // 2), dtype=jnp.int32)   # both classes present

    # f32 / HIGHEST path -- tight parity with the reference.
    loss, scores = angular_iso_loss(x, labels, center, m_real, m_fake, alpha)
    jax.block_until_ready((loss, scores))
    ref_loss, ref_scores = _reference(x, labels, center, m_real, m_fake, alpha)
    assert jnp.allclose(loss, ref_loss, rtol=1e-4, atol=1e-4), (loss, ref_loss)
    assert jnp.allclose(scores, ref_scores, rtol=1e-4, atol=1e-4)

    # bf16 fast path (DEFAULT-precision MXU) -- looser tolerance by design.
    xb = x.astype(jnp.bfloat16)
    loss_b, scores_b = angular_iso_loss(xb, labels, center, m_real, m_fake, alpha)
    jax.block_until_ready((loss_b, scores_b))
    ref_loss_b, ref_scores_b = _reference(xb, labels, center, m_real, m_fake, alpha)
    assert jnp.allclose(loss_b, ref_loss_b, rtol=2e-2, atol=2e-2), (loss_b, ref_loss_b)
    assert jnp.allclose(scores_b, ref_scores_b, rtol=2e-2, atol=2e-2)

    print("KERNEL_OK")
</pallas_src>

<mosaic_0001>
module attributes {stable_mosaic.version = 11 : i64} {
  func.func @_cosine_scores_kernel(%arg0: i32, %arg1: memref<16x256xf32, #tpu.memory_space<vmem>>, %arg2: memref<1x256xf32, #tpu.memory_space<vmem>>, %arg3: memref<1x16xf32, #tpu.memory_space<vmem>>) attributes {dimension_semantics = [#tpu.dimension_semantics<parallel>], iteration_bounds = array<i64: 1>, scalar_prefetch = 0 : i64, scratch_operands = 0 : i64, tpu.core_type = #tpu.core_type<tc>, window_params = [{transform_indices = @transform_0, window_bounds = array<i64: 16, 256>}, {pipeline_mode = #tpu.pipeline_mode<synchronous>, transform_indices = @transform_1, window_bounds = array<i64: 1, 256>}, {transform_indices = @transform_2, window_bounds = array<i64: 1, 16>}]} {
    %c0 = arith.constant 0 : index
    %c0_0 = arith.constant 0 : index
    %0 = vector.load %arg2[%c0, %c0_0] : memref<1x256xf32, #tpu.memory_space<vmem>>, vector<1x256xf32>
    %c0_1 = arith.constant 0 : index
    %c0_2 = arith.constant 0 : index
    %1 = vector.load %arg1[%c0_1, %c0_2] : memref<16x256xf32, #tpu.memory_space<vmem>>, vector<16x256xf32>
    %cst = arith.constant dense<0.000000e+00> : vector<1x16xf32>
    %2 = tpu.matmul %0, %1, %cst {dimension_numbers = #tpu.dot_dimension_numbers<[1], [1], [0], [0], [0, 0, 1, 0], [], []>, precision = #tpu.contract_precision<fp32>} : vector<1x256xf32>, vector<16x256xf32>, vector<1x16xf32> -> vector<1x16xf32>
    %cst_3 = arith.constant 1.000000e+00 : f32
    %3 = vector.broadcast %cst_3 : f32 to vector<1x256xf32>
    %4 = arith.mulf %1, %1 : vector<16x256xf32>
    %cst_4 = arith.constant dense<0.000000e+00> : vector<1x16xf32>
    %5 = tpu.matmul %3, %4, %cst_4 {dimension_numbers = #tpu.dot_dimension_numbers<[1], [1], [0], [0], [0, 0, 1, 0], [], []>, precision = #tpu.contract_precision<fp32>} : vector<1x256xf32>, vector<16x256xf32>, vector<1x16xf32> -> vector<1x16xf32>
    %6 = math.sqrt %5 : vector<1x16xf32>
    %cst_5 = arith.constant 9.99999996E-13 : f32
    %7 = vector.broadcast %cst_5 : f32 to vector<1x16xf32>
    %8 = arith.maximumf %6, %7 : vector<1x16xf32>
    %9 = arith.divf %2, %8 : vector<1x16xf32>
    %c0_6 = arith.constant 0 : index
    %c0_7 = arith.constant 0 : index
    %10 = vector.load %arg3[%c0_6, %c0_7] : memref<1x16xf32, #tpu.memory_space<vmem>>, vector<1x16xf32>
    tpu.vector_store %arg3[%c0_6, %c0_7], %9 {strides = array<i32>} : memref<1x16xf32, #tpu.memory_space<vmem>>, vector<1x16xf32>,
    return
  }
  func.func @transform_0(%arg0: i32) -> (i32, i32) {
    %c0_i32 = arith.constant 0 : i32
    %c0_i32_0 = arith.constant 0 : i32
    return %arg0, %c0_i32 : i32, i32
  }
  func.func @transform_1(%arg0: i32) -> (i32, i32) {
    %c0_i32 = arith.constant 0 : i32
    %c0_i32_0 = arith.constant 0 : i32
    %c0_i32_1 = arith.constant 0 : i32
    return %c0_i32, %c0_i32_0 : i32, i32
  }
  func.func @transform_2(%arg0: i32) -> (i32, i32) {
    %c0_i32 = arith.constant 0 : i32
    %c0_i32_0 = arith.constant 0 : i32
    return %c0_i32, %arg0 : i32, i32
  }
}

</mosaic_0001>

<llo_original>
// kernel: tpu_custom_call.1
$region0: #{tpu_custom_call.1}
  #allocation0 [shape = 'u32[]', space=smem, size = 0x4, offset = 0x4, fixed_abs, tag = 'smem constant byte address 0x4 - core index']
  #allocation1 [shape = 'u32[144,128]{1,0:T(1,128)}', space=vmem, size = 0x12000, scoped, tag = 'internal scratch']
  %s0 = inlined_call_operand.hbm [shape: f32[16,256], index: 0, kind: input, shape index: {}]
  %s1 = inlined_call_operand.vmem [shape: f32[1,256], index: 1, kind: input, shape index: {}]
  %s2 = inlined_call_operand.hbm [shape: f32[1,16], index: 2, kind: output, shape index: {}]
  %s3 = sld [smem:[#allocation0]]
  $region22: #{tpu_custom_call.1} parent=0
    _
  %s5 = ssub.s32 1, %s3
  %s6 = scalar_select 0, %s5, %s3
  $region1: #{tpu_custom_call.1} parent=0
    #allocation2 [shape = 'u8[16384]{0}', space=vmem, size = 0x4000, scoped, tag = 'input window, operand 0, single buffered']
    #allocation3 [shape = 's32[1]{0}', space=sflag, size = 0x4, scoped, tag = 'scoped memory for tpu_custom_call.1']
    #allocation4 [shape = 's32[1]{0}', space=sflag, size = 0x4, scoped, tag = 'scoped memory for tpu_custom_call.1']
    #allocation5 [shape = 'u8[512]{0}', space=vmem, size = 0x400, scoped, tag = 'output window, operand 0, single buffered']
    %7 = vsyncpa [#allocation3], 0
    %8 = vsyncpa [#allocation4], 0
    // Predicated region
    $region2: #{tpu_custom_call.1} parent=1 // pred_check
      _
    $region3: #{tpu_custom_call.1} parent=1 // pred_check_branch
      %10 = sbr.rel (0) target = $region5
    $region4: #{tpu_custom_call.1} parent=1 // pred_region
      %s12 = ssub.s32 512, 512
      %13 = vsyncadd [#allocation3], %s12
      %s14 = sshll.u32 [#allocation2], 4
      %s15 = int_to_ptr.vmem [resolvable:$true] %s14
      %20 = dma.hbm_to_vmem [thread:$0]  %s0, 512, %s15, [#allocation3], 256, 256, 16
    $region5: #{tpu_custom_call.1} parent=1 // pred_fallthru
      _
    // Predicated region
    $region6: #{tpu_custom_call.1} parent=1 // pred_check
      _
    $region7: #{tpu_custom_call.1} parent=1 // pred_check_branch
      %22 = sbr.rel (0) target = $region9
    $region8: #{tpu_custom_call.1} parent=1 // pred_region
      _
    $region9: #{tpu_custom_call.1} parent=1 // pred_fallthru
      _
    // Predicated region
    $region10: #{tpu_custom_call.1} parent=1 // pred_check
      _
    $region11: #{tpu_custom_call.1} parent=1 // pred_check_branch
      %24 = sbr.rel (0) target = $region13
    $region12: #{tpu_custom_call.1} parent=1 // pred_region
      %25 = dma.done [#allocation3], 512
    $region13: #{tpu_custom_call.1} parent=1 // pred_fallthru
      _
    %v26 = vld [vmem:[%s1] sm:$0x3]
    %v27 = vld [vmem:[#allocation2] sm:$0xff]
    %v28 = vld [vmem:[#allocation2 + $0x8] sm:$0xff]
    %v29 = vld [vmem:[#allocation2 + $0x10] sm:$0xff]
    %v30 = vld [vmem:[#allocation2 + $0x18] sm:$0xff]
    %v32 = vlaneseq
    %v33 = vshrl.u32 %v32, 7
    %v34 = vsub.s32 0, %v33
    %v35 = vrot.slane %v26, %v34
    %v36 = vlaneseq
    %v37 = vshrl.u32 %v36, 7
    %v38 = vsub.s32 1, %v37
    %v39 = vrot.slane %v26, %v38
    %v42 = vand.u32 %v28, 4294901760
    %43 = vmatprep.subr.mxu0 %v42
    %v44 = vand.u32 %v27, 4294901760
    %45 = vmatpush1.xpose.msra.mxu0 %v44
    %v46 = vand.u32 %v30, 4294901760
    %47 = vmatprep.subr.mxu0 %v46
    %v48 = vand.u32 %v29, 4294901760
    %49 = vmatpush1.xpose.msra.mxu0 %v48
    %50 = vmatprep.subr.mxu0 0.0
    %51 = vmatpush1.xpose.msra.mxu0 0.0
    %52 = vmatprep.subr.mxu0 0.0
    %53 = vmatpush1.xpose.msra.mxu0 0.0
    %54 = vmatprep.subr.mxu0 0.0
    %55 = vmatpush1.xpose.msra.mxu0 0.0
    %56 = vmatprep.subr.mxu0 0.0
    %57 = vmatpush1.xpose.msra.mxu0 0.0
    %58 = vmatprep.subr.mxu0 0.0
    %59 = vmatpush1.xpose.msra.mxu0 0.0
    %60 = vmatprep.subr.mxu0 0.0
    %61 = vmatpush1.xpose.msra.mxu0 0.0
    %62 = vmatprep.subr.mxu0 0.0
    %63 = vmatpush1.xpose.msra.mxu0 0.0
    %64 = vmatprep.subr.mxu0 0.0
    %65 = vmatpush1.xpose.msra.mxu0 0.0
    %66 = vmatprep.subr.mxu0 0.0
    %67 = vmatpush1.xpose.msra.mxu0 0.0
    %68 = vmatprep.subr.mxu0 0.0
    %69 = vmatpush1.xpose.msra.mxu0 0.0
    %70 = vmatprep.subr.mxu0 0.0
    %71 = vmatpush1.xpose.msra.mxu0 0.0
    %72 = vmatprep.subr.mxu0 0.0
    %73 = vmatpush1.xpose.msra.mxu0 0.0
    %74 = vmatprep.subr.mxu0 0.0
    %75 = vmatpush1.xpose.msra.mxu0 0.0
    %76 = vmatprep.subr.mxu0 0.0
    %77 = vmatpush1.xpose.msra.mxu0 0.0
    %78 = vmatprep.subr.mxu0 0.0
    %79 = vmatpush1.xpose.msra.mxu0 0.0
    %80 = vmatprep.subr.mxu0 0.0
    %81 = vmatpush1.xpose.msra.mxu0 0.0
    %82 = vmatprep.subr.mxu0 0.0
    %83 = vmatpush1.xpose.msra.mxu0 0.0
    %84 = vmatprep.subr.mxu0 0.0
    %85 = vmatpush1.xpose.msra.mxu0 0.0
    %86 = vmatprep.subr.mxu0 0.0
    %87 = vmatpush1.xpose.msra.mxu0 0.0
    %88 = vmatprep.subr.mxu0 0.0
    %89 = vmatpush1.xpose.msra.mxu0 0.0
    %90 = vmatprep.subr.mxu0 0.0
    %91 = vmatpush1.xpose.msra.mxu0 0.0
    %92 = vmatprep.subr.mxu0 0.0
    %93 = vmatpush1.xpose.msra.mxu0 0.0
    %94 = vmatprep.subr.mxu0 0.0
    %95 = vmatpush1.xpose.msra.mxu0 0.0
    %96 = vmatprep.subr.mxu0 0.0
    %97 = vmatpush1.xpose.msra.mxu0 0.0
    %98 = vmatprep.subr.mxu0 0.0
    %99 = vmatpush1.xpose.msra.mxu0 0.0
    %100 = vmatprep.subr.mxu0 0.0
    %101 = vmatpush1.xpose.msra.mxu0 0.0
    %102 = vmatprep.subr.mxu0 0.0
    %103 = vmatpush1.xpose.msra.mxu0 0.0
    %104 = vmatprep.subr.mxu0 0.0
    %105 = vmatpush1.xpose.msra.mxu0 0.0
    %106 = vmatprep.subr.mxu0 0.0
    %107 = vmatpush1.xpose.msra.mxu0 0.0
    %108 = vmatprep.subr.mxu0 0.0
    %109 = vmatpush1.xpose.msra.mxu0 0.0
    %v110 = vand.u32 %v39, 4294901760
    %v111 = vsub.f32 %v39, %v110
    %v112 = vand.u32 %v111, 4294901760
    %v113 = vsub.f32 %v111, %v112
    %v114 = vand.u32 %v113, 4294901760
    %115 = vmatprep.mubr.f32.mxu0 %v114
    %v116 = vand.u32 %v35, 4294901760
    %v117 = vsub.f32 %v35, %v116
    %v118 = vand.u32 %v117, 4294901760
    %v119 = vsub.f32 %v117, %v118
    %v120 = vand.u32 %v119, 4294901760
    %121 = vmatmul.mubr.f32.gmra.mrb[0].mxu0 %v120
    %v122 = vpop.f32.mrb[0].mxu0
    %v123 = vadd.f32 0.0, %v122
    %v124 = vpop.f32.mrb[0].mxu0
    %125 = vdwg.mxu0
    %v126 = vand.u32 %v28, 4294901760
    %v127 = vsub.f32 %v28, %v126
    %v128 = vand.u32 %v127, 4294901760
    %v129 = vsub.f32 %v127, %v128
    %v130 = vand.u32 %v129, 4294901760
    %131 = vmatprep.subr.mxu0 %v130
    %v132 = vand.u32 %v27, 4294901760
    %v133 = vsub.f32 %v27, %v132
    %v134 = vand.u32 %v133, 4294901760
    %v135 = vsub.f32 %v133, %v134
    %v136 = vand.u32 %v135, 4294901760
    %137 = vmatpush1.xpose.msra.mxu0 %v136
    %v138 = vand.u32 %v30, 4294901760
    %v139 = vsub.f32 %v30, %v138
    %v140 = vand.u32 %v139, 4294901760
    %v141 = vsub.f32 %v139, %v140
    %v142 = vand.u32 %v141, 4294901760
    %143 = vmatprep.subr.mxu0 %v142
    %v144 = vand.u32 %v29, 4294901760
    %v145 = vsub.f32 %v29, %v144
    %v146 = vand.u32 %v145, 4294901760
    %v147 = vsub.f32 %v145, %v146
    %v148 = vand.u32 %v147, 4294901760
    %149 = vmatpush1.xpose.msra.mxu0 %v148
    %150 = vmatprep.subr.mxu0 0.0
    %151 = vmatpush1.xpose.msra.mxu0 0.0
    %152 = vmatprep.subr.mxu0 0.0
    %153 = vmatpush1.xpose.msra.mxu0 0.0
    %154 = vmatprep.subr.mxu0 0.0
    %155 = vmatpush1.xpose.msra.mxu0 0.0
    %156 = vmatprep.subr.mxu0 0.0
    %157 = vmatpush1.xpose.msra.mxu0 0.0
    %158 = vmatprep.subr.mxu0 0.0
    %159 = vmatpush1.xpose.msra.mxu0 0.0
    %160 = vmatprep.subr.mxu0 0.0
    %161 = vmatpush1.xpose.msra.mxu0 0.0
    %162 = vmatprep.subr.mxu0 0.0
    %163 = vmatpush1.xpose.msra.mxu0 0.0
    %164 = vmatprep.subr.mxu0 0.0
    %165 = vmatpush1.xpose.msra.mxu0 0.0
    %166 = vmatprep.subr.mxu0 0.0
    %167 = vmatpush1.xpose.msra.mxu0 0.0
    %168 = vmatprep.subr.mxu0 0.0
    %169 = vmatpush1.xpose.msra.mxu0 0.0
    %170 = vmatprep.subr.mxu0 0.0
    %171 = vmatpush1.xpose.msra.mxu0 0.0
    %172 = vmatprep.subr.mxu0 0.0
    %173 = vmatpush1.xpose.msra.mxu0 0.0
    %174 = vmatprep.subr.mxu0 0.0
    %175 = vmatpush1.xpose.msra.mxu0 0.0
    %176 = vmatprep.subr.mxu0 0.0
    %177 = vmatpush1.xpose.msra.mxu0 0.0
    %178 = vmatprep.subr.mxu0 0.0
    %179 = vmatpush1.xpose.msra.mxu0 0.0
    %180 = vmatprep.subr.mxu0 0.0
    %181 = vmatpush1.xpose.msra.mxu0 0.0
    %182 = vmatprep.subr.mxu0 0.0
    %183 = vmatpush1.xpose.msra.mxu0 0.0
    %184 = vmatprep.subr.mxu0 0.0
    %185 = vmatpush1.xpose.msra.mxu0 0.0
    %186 = vmatprep.subr.mxu0 0.0
    %187 = vmatpush1.xpose.msra.mxu0 0.0
    %188 = vmatprep.subr.mxu0 0.0
    %189 = vmatpush1.xpose.msra.mxu0 0.0
    %190 = vmatprep.subr.mxu0 0.0
    %191 = vmatpush1.xpose.msra.mxu0 0.0
    %192 = vmatprep.subr.mxu0 0.0
    %193 = vmatpush1.xpose.msra.mxu0 0.0
    %194 = vmatprep.subr.mxu0 0.0
    %195 = vmatpush1.xpose.msra.mxu0 0.0
    %196 = vmatprep.subr.mxu0 0.0
    %197 = vmatpush1.xpose.msra.mxu0 0.0
    %198 = vmatprep.subr.mxu0 0.0
    %199 = vmatpush1.xpose.msra.mxu0 0.0
    %200 = vmatprep.subr.mxu0 0.0
    %201 = vmatpush1.xpose.msra.mxu0 0.0
    %202 = vmatprep.subr.mxu0 0.0
    %203 = vmatpush1.xpose.msra.mxu0 0.0
    %204 = vmatprep.subr.mxu0 0.0
    %205 = vmatpush1.xpose.msra.mxu0 0.0
    %206 = vmatprep.subr.mxu0 0.0
    %207 = vmatpush1.xpose.msra.mxu0 0.0
    %208 = vmatprep.subr.mxu0 0.0
    %209 = vmatpush1.xpose.msra.mxu0 0.0
    %v210 = vand.u32 %v39, 4294901760
    %211 = vmatprep.mubr.f32.mxu0 %v210
    %v212 = vand.u32 %v35, 4294901760
    %213 = vmatmul.mubr.f32.gmra.mrb[0].mxu0 %v212
    %v214 = vpop.f32.mrb[0].mxu0
    %v215 = vadd.f32 %v123, %v214
    %v216 = vpop.f32.mrb[0].mxu0
    %217 = vdwg.mxu0
    %v218 = vand.u32 %v28, 4294901760
    %v219 = vsub.f32 %v28, %v218
    %220 = vmatprep.subr.mxu0 %v219
    %v221 = vand.u32 %v27, 4294901760
    %v222 = vsub.f32 %v27, %v221
    %223 = vmatpush1.xpose.msra.mxu0 %v222
    %v224 = vand.u32 %v30, 4294901760
    %v225 = vsub.f32 %v30, %v224
    %226 = vmatprep.subr.mxu0 %v225
    %v227 = vand.u32 %v29, 4294901760
    %v228 = vsub.f32 %v29, %v227
    %229 = vmatpush1.xpose.msra.mxu0 %v228
    %230 = vmatprep.subr.mxu0 0.0
    %231 = vmatpush1.xpose.msra.mxu0 0.0
    %232 = vmatprep.subr.mxu0 0.0
    %233 = vmatpush1.xpose.msra.mxu0 0.0
    %234 = vmatprep.subr.mxu0 0.0
    %235 = vmatpush1.xpose.msra.mxu0 0.0
    %236 = vmatprep.subr.mxu0 0.0
    %237 = vmatpush1.xpose.msra.mxu0 0.0
    %238 = vmatprep.subr.mxu0 0.0
    %239 = vmatpush1.xpose.msra.mxu0 0.0
    %240 = vmatprep.subr.mxu0 0.0
    %241 = vmatpush1.xpose.msra.mxu0 0.0
    %242 = vmatprep.subr.mxu0 0.0
    %243 = vmatpush1.xpose.msra.mxu0 0.0
    %244 = vmatprep.subr.mxu0 0.0
    %245 = vmatpush1.xpose.msra.mxu0 0.0
    %246 = vmatprep.subr.mxu0 0.0
    %247 = vmatpush1.xpose.msra.mxu0 0.0
    %248 = vmatprep.subr.mxu0 0.0
    %249 = vmatpush1.xpose.msra.mxu0 0.0
    %250 = vmatprep.subr.mxu0 0.0
    %251 = vmatpush1.xpose.msra.mxu0 0.0
    %252 = vmatprep.subr.mxu0 0.0
    %253 = vmatpush1.xpose.msra.mxu0 0.0
    %254 = vmatprep.subr.mxu0 0.0
    %255 = vmatpush1.xpose.msra.mxu0 0.0
    %256 = vmatprep.subr.mxu0 0.0
    %257 = vmatpush1.xpose.msra.mxu0 0.0
    %258 = vmatprep.subr.mxu0 0.0
    %259 = vmatpush1.xpose.msra.mxu0 0.0
    %260 = vmatprep.subr.mxu0 0.0
    %261 = vmatpush1.xpose.msra.mxu0 0.0
    %262 = vmatprep.subr.mxu0 0.0
    %263 = vmatpush1.xpose.msra.mxu0 0.0
    %264 = vmatprep.subr.mxu0 0.0
    %265 = vmatpush1.xpose.msra.mxu0 0.0
    %266 = vmatprep.subr.mxu0 0.0
    %267 = vmatpush1.xpose.msra.mxu0 0.0
    %268 = vmatprep.subr.mxu0 0.0
    %269 = vmatpush1.xpose.msra.mxu0 0.0
    %270 = vmatprep.subr.mxu0 0.0
    %271 = vmatpush1.xpose.msra.mxu0 0.0
    %272 = vmatprep.subr.mxu0 0.0
    %273 = vmatpush1.xpose.msra.mxu0 0.0
    %274 = vmatprep.subr.mxu0 0.0
    %275 = vmatpush1.xpose.msra.mxu0 0.0
    %276 = vmatprep.subr.mxu0 0.0
    %277 = vmatpush1.xpose.msra.mxu0 0.0
    %278 = vmatprep.subr.mxu0 0.0
    %279 = vmatpush1.xpose.msra.mxu0 0.0
    %280 = vmatprep.subr.mxu0 0.0
    %281 = vmatpush1.xpose.msra.mxu0 0.0
    %282 = vmatprep.subr.mxu0 0.0
    %283 = vmatpush1.xpose.msra.mxu0 0.0
    %284 = vmatprep.subr.mxu0 0.0
    %285 = vmatpush1.xpose.msra.mxu0 0.0
    %286 = vmatprep.subr.mxu0 0.0
    %287 = vmatpush1.xpose.msra.mxu0 0.0
    %288 = vmatprep.subr.mxu0 0.0
    %289 = vmatpush1.xpose.msra.mxu0 0.0
    %v290 = vand.u32 %v39, 4294901760
    %v291 = vsub.f32 %v39, %v290
    %292 = vmatprep.mubr.f32.mxu0 %v291
    %v293 = vand.u32 %v35, 4294901760
    %v294 = vsub.f32 %v35, %v293
    %295 = vmatmul.mubr.f32.gmra.mrb[0].mxu0 %v294
    %v296 = vpop.f32.mrb[0].mxu0
    %v297 = vadd.f32 %v215, %v296
    %v298 = vpop.f32.mrb[0].mxu0
    %299 = vdwg.mxu0
    %v300 = vand.u32 %v28, 4294901760
    %301 = vmatprep.subr.mxu0 %v300
    %v302 = vand.u32 %v27, 4294901760
    %303 = vmatpush1.xpose.msra.mxu0 %v302
    %v304 = vand.u32 %v30, 4294901760
    %305 = vmatprep.subr.mxu0 %v304
    %v306 = vand.u32 %v29, 4294901760
    %307 = vmatpush1.xpose.msra.mxu0 %v306
    %308 = vmatprep.subr.mxu0 0.0
    %309 = vmatpush1.xpose.msra.mxu0 0.0
    %310 = vmatprep.subr.mxu0 0.0
    %311 = vmatpush1.xpose.msra.mxu0 0.0
    %312 = vmatprep.subr.mxu0 0.0
    %313 = vmatpush1.xpose.msra.mxu0 0.0
    %314 = vmatprep.subr.mxu0 0.0
    %315 = vmatpush1.xpose.msra.mxu0 0.0
    %316 = vmatprep.subr.mxu0 0.0
    %317 = vmatpush1.xpose.msra.mxu0 0.0
    %318 = vmatprep.subr.mxu0 0.0
    %319 = vmatpush1.xpose.msra.mxu0 0.0
    %320 = vmatprep.subr.mxu0 0.0
    %321 = vmatpush1.xpose.msra.mxu0 0.0
    %322 = vmatprep.subr.mxu0 0.0
    %323 = vmatpush1.xpose.msra.mxu0 0.0
    %324 = vmatprep.subr.mxu0 0.0
    %325 = vmatpush1.xpose.msra.mxu0 0.0
    %326 = vmatprep.subr.mxu0 0.0
    %327 = vmatpush1.xpose.msra.mxu0 0.0
    %328 = vmatprep.subr.mxu0 0.0
    %329 = vmatpush1.xpose.msra.mxu0 0.0
    %330 = vmatprep.subr.mxu0 0.0
    %331 = vmatpush1.xpose.msra.mxu0 0.0
    %332 = vmatprep.subr.mxu0 0.0
    %333 = vmatpush1.xpose.msra.mxu0 0.0
    %334 = vmatprep.subr.mxu0 0.0
    %335 = vmatpush1.xpose.msra.mxu0 0.0
    %336 = vmatprep.subr.mxu0 0.0
    %337 = vmatpush1.xpose.msra.mxu0 0.0
    %338 = vmatprep.subr.mxu0 0.0
    %339 = vmatpush1.xpose.msra.mxu0 0.0
    %340 = vmatprep.subr.mxu0 0.0
    %341 = vmatpush1.xpose.msra.mxu0 0.0
    %342 = vmatprep.subr.mxu0 0.0
    %343 = vmatpush1.xpose.msra.mxu0 0.0
    %344 = vmatprep.subr.mxu0 0.0
    %345 = vmatpush1.xpose.msra.mxu0 0.0
    %346 = vmatprep.subr.mxu0 0.0
    %347 = vmatpush1.xpose.msra.mxu0 0.0
    %348 = vmatprep.subr.mxu0 0.0
    %349 = vmatpush1.xpose.msra.mxu0 0.0
    %350 = vmatprep.subr.mxu0 0.0
    %351 = vmatpush1.xpose.msra.mxu0 0.0
    %352 = vmatprep.subr.mxu0 0.0
    %353 = vmatpush1.xpose.msra.mxu0 0.0
    %354 = vmatprep.subr.mxu0 0.0
    %355 = vmatpush1.xpose.msra.mxu0 0.0
    %356 = vmatprep.subr.mxu0 0.0
    %357 = vmatpush1.xpose.msra.mxu0 0.0
    %358 = vmatprep.subr.mxu0 0.0
    %359 = vmatpush1.xpose.msra.mxu0 0.0
    %360 = vmatprep.subr.mxu0 0.0
    %361 = vmatpush1.xpose.msra.mxu0 0.0
    %362 = vmatprep.subr.mxu0 0.0
    %363 = vmatpush1.xpose.msra.mxu0 0.0
    %364 = vmatprep.subr.mxu0 0.0
    %365 = vmatpush1.xpose.msra.mxu0 0.0
    %366 = vmatprep.subr.mxu0 0.0
    %367 = vmatpush1.xpose.msra.mxu0 0.0
    %v368 = vand.u32 %v39, 4294901760
    %v369 = vsub.f32 %v39, %v368
    %v370 = vand.u32 %v369, 4294901760
    %371 = vmatprep.mubr.f32.mxu0 %v370
    %v372 = vand.u32 %v35, 4294901760
    %v373 = vsub.f32 %v35, %v372
    %v374 = vand.u32 %v373, 4294901760
    %375 = vmatmul.mubr.f32.gmra.mrb[0].mxu0 %v374
    %v376 = vpop.f32.mrb[0].mxu0
    %v377 = vadd.f32 %v297, %v376
    %v378 = vpop.f32.mrb[0].mxu0
    %379 = vdwg.mxu0
    %v380 = vand.u32 %v28, 4294901760
    %v381 = vsub.f32 %v28, %v380
    %v382 = vand.u32 %v381, 4294901760
    %383 = vmatprep.subr.mxu0 %v382
    %v384 = vand.u32 %v27, 4294901760
    %v385 = vsub.f32 %v27, %v384
    %v386 = vand.u32 %v385, 4294901760
    %387 = vmatpush1.xpose.msra.mxu0 %v386
    %v388 = vand.u32 %v30, 4294901760
    %v389 = vsub.f32 %v30, %v388
    %v390 = vand.u32 %v389, 4294901760
    %391 = vmatprep.subr.mxu0 %v390
    %v392 = vand.u32 %v29, 4294901760
    %v393 = vsub.f32 %v29, %v392
    %v394 = vand.u32 %v393, 4294901760
    %395 = vmatpush1.xpose.msra.mxu0 %v394
    %396 = vmatprep.subr.mxu0 0.0
    %397 = vmatpush1.xpose.msra.mxu0 0.0
    %398 = vmatprep.subr.mxu0 0.0
    %399 = vmatpush1.xpose.msra.mxu0 0.0
    %400 = vmatprep.subr.mxu0 0.0
    %401 = vmatpush1.xpose.msra.mxu0 0.0
    %402 = vmatprep.subr.mxu0 0.0
    %403 = vmatpush1.xpose.msra.mxu0 0.0
    %404 = vmatprep.subr.mxu0 0.0
    %405 = vmatpush1.xpose.msra.mxu0 0.0
    %406 = vmatprep.subr.mxu0 0.0
    %407 = vmatpush1.xpose.msra.mxu0 0.0
    %408 = vmatprep.subr.mxu0 0.0
    %409 = vmatpush1.xpose.msra.mxu0 0.0
    %410 = vmatprep.subr.mxu0 0.0
    %411 = vmatpush1.xpose.msra.mxu0 0.0
    %412 = vmatprep.subr.mxu0 0.0
    %413 = vmatpush1.xpose.msra.mxu0 0.0
    %414 = vmatprep.subr.mxu0 0.0
    %415 = vmatpush1.xpose.msra.mxu0 0.0
    %416 = vmatprep.subr.mxu0 0.0
    %417 = vmatpush1.xpose.msra.mxu0 0.0
    %418 = vmatprep.subr.mxu0 0.0
    %419 = vmatpush1.xpose.msra.mxu0 0.0
    %420 = vmatprep.subr.mxu0 0.0
    %421 = vmatpush1.xpose.msra.mxu0 0.0
    %422 = vmatprep.subr.mxu0 0.0
    %423 = vmatpush1.xpose.msra.mxu0 0.0
    %424 = vmatprep.subr.mxu0 0.0
    %425 = vmatpush1.xpose.msra.mxu0 0.0
    %426 = vmatprep.subr.mxu0 0.0
    %427 = vmatpush1.xpose.msra.mxu0 0.0
    %428 = vmatprep.subr.mxu0 0.0
    %429 = vmatpush1.xpose.msra.mxu0 0.0
    %430 = vmatprep.subr.mxu0 0.0
    %431 = vmatpush1.xpose.msra.mxu0 0.0
    %432 = vmatprep.subr.mxu0 0.0
    %433 = vmatpush1.xpose.msra.mxu0 0.0
    %434 = vmatprep.subr.mxu0 0.0
    %435 = vmatpush1.xpose.msra.mxu0 0.0
    %436 = vmatprep.subr.mxu0 0.0
    %437 = vmatpush1.xpose.msra.mxu0 0.0
    %438 = vmatprep.subr.mxu0 0.0
    %439 = vmatpush1.xpose.msra.mxu0 0.0
    %440 = vmatprep.subr.mxu0 0.0
    %441 = vmatpush1.xpose.msra.mxu0 0.0
    %442 = vmatprep.subr.mxu0 0.0
    %443 = vmatpush1.xpose.msra.mxu0 0.0
    %444 = vmatprep.subr.mxu0 0.0
    %445 = vmatpush1.xpose.msra.mxu0 0.0
    %446 = vmatprep.subr.mxu0 0.0
    %447 = vmatpush1.xpose.msra.mxu0 0.0
    %448 = vmatprep.subr.mxu0 0.0
    %449 = vmatpush1.xpose.msra.mxu0 0.0
    %450 = vmatprep.subr.mxu0 0.0
    %451 = vmatpush1.xpose.msra.mxu0 0.0
    %452 = vmatprep.subr.mxu0 0.0
    %453 = vmatpush1.xpose.msra.mxu0 0.0
    %454 = vmatprep.subr.mxu0 0.0
    %455 = vmatpush1.xpose.msra.mxu0 0.0
    %v456 = vand.u32 %v39, 4294901760
    %457 = vmatprep.mubr.f32.mxu0 %v456
    %v458 = vand.u32 %v35, 4294901760
    %459 = vmatmul.mubr.f32.gmra.mrb[0].mxu0 %v458
    %v460 = vpop.f32.mrb[0].mxu0
    %v461 = vadd.f32 %v377, %v460
    %v462 = vpop.f32.mrb[0].mxu0
    %463 = vdwg.mxu0
    %v464 = vand.u32 %v28, 4294901760
    %465 = vmatprep.subr.mxu0 %v464
    %v466 = vand.u32 %v27, 4294901760
    %467 = vmatpush1.xpose.msra.mxu0 %v466
    %v468 = vand.u32 %v30, 4294901760
    %469 = vmatprep.subr.mxu0 %v468
    %v470 = vand.u32 %v29, 4294901760
    %471 = vmatpush1.xpose.msra.mxu0 %v470
    %472 = vmatprep.subr.mxu0 0.0
    %473 = vmatpush1.xpose.msra.mxu0 0.0
    %474 = vmatprep.subr.mxu0 0.0
    %475 = vmatpush1.xpose.msra.mxu0 0.0
    %476 = vmatprep.subr.mxu0 0.0
    %477 = vmatpush1.xpose.msra.mxu0 0.0
    %478 = vmatprep.subr.mxu0 0.0
    %479 = vmatpush1.xpose.msra.mxu0 0.0
    %480 = vmatprep.subr.mxu0 0.0
    %481 = vmatpush1.xpose.msra.mxu0 0.0
    %482 = vmatprep.subr.mxu0 0.0
    %483 = vmatpush1.xpose.msra.mxu0 0.0
    %484 = vmatprep.subr.mxu0 0.0
    %485 = vmatpush1.xpose.msra.mxu0 0.0
    %486 = vmatprep.subr.mxu0 0.0
    %487 = vmatpush1.xpose.msra.mxu0 0.0
    %488 = vmatprep.subr.mxu0 0.0
    %489 = vmatpush1.xpose.msra.mxu0 0.0
    %490 = vmatprep.subr.mxu0 0.0
    %491 = vmatpush1.xpose.msra.mxu0 0.0
    %492 = vmatprep.subr.mxu0 0.0
    %493 = vmatpush1.xpose.msra.mxu0 0.0
    %494 = vmatprep.subr.mxu0 0.0
    %495 = vmatpush1.xpose.msra.mxu0 0.0
    %496 = vmatprep.subr.mxu0 0.0
    %497 = vmatpush1.xpose.msra.mxu0 0.0
    %498 = vmatprep.subr.mxu0 0.0
    %499 = vmatpush1.xpose.msra.mxu0 0.0
    %500 = vmatprep.subr.mxu0 0.0
    %501 = vmatpush1.xpose.msra.mxu0 0.0
    %502 = vmatprep.subr.mxu0 0.0
    %503 = vmatpush1.xpose.msra.mxu0 0.0
    %504 = vmatprep.subr.mxu0 0.0
    %505 = vmatpush1.xpose.msra.mxu0 0.0
    %506 = vmatprep.subr.mxu0 0.0
    %507 = vmatpush1.xpose.msra.mxu0 0.0
    %508 = vmatprep.subr.mxu0 0.0
    %509 = vmatpush1.xpose.msra.mxu0 0.0
    %510 = vmatprep.subr.mxu0 0.0
    %511 = vmatpush1.xpose.msra.mxu0 0.0
    %512 = vmatprep.subr.mxu0 0.0
    %513 = vmatpush1.xpose.msra.mxu0 0.0
    %514 = vmatprep.subr.mxu0 0.0
    %515 = vmatpush1.xpose.msra.mxu0 0.0
    %516 = vmatprep.subr.mxu0 0.0
    %517 = vmatpush1.xpose.msra.mxu0 0.0
    %518 = vmatprep.subr.mxu0 0.0
    %519 = vmatpush1.xpose.msra.mxu0 0.0
    %520 = vmatprep.subr.mxu0 0.0
    %521 = vmatpush1.xpose.msra.mxu0 0.0
    %522 = vmatprep.subr.mxu0 0.0
    %523 = vmatpush1.xpose.msra.mxu0 0.0
    %524 = vmatprep.subr.mxu0 0.0
    %525 = vmatpush1.xpose.msra.mxu0 0.0
    %526 = vmatprep.subr.mxu0 0.0
    %527 = vmatpush1.xpose.msra.mxu0 0.0
    %528 = vmatprep.subr.mxu0 0.0
    %529 = vmatpush1.xpose.msra.mxu0 0.0
    %530 = vmatprep.subr.mxu0 0.0
    %531 = vmatpush1.xpose.msra.mxu0 0.0
    %v532 = vand.u32 %v39, 4294901760
    %533 = vmatprep.mubr.f32.mxu0 %v532
    %v534 = vand.u32 %v35, 4294901760
    %535 = vmatmul.mubr.f32.gmra.mrb[0].mxu0 %v534
    %v536 = vpop.f32.mrb[0].mxu0
    %v537 = vadd.f32 %v461, %v536
    %v538 = vpop.f32.mrb[0].mxu0
    %539 = vdwg.mxu0
    %v540 = vmul.f32 %v27, %v27
    %v541 = vmul.f32 %v28, %v28
    %v542 = vmul.f32 %v29, %v29
    %v543 = vmul.f32 %v30, %v30
    %v544 = vand.u32 %v541, 4294901760
    %545 = vmatprep.subr.mxu0 %v544
    %v546 = vand.u32 %v540, 4294901760
    %547 = vmatpush1.xpose.msra.mxu0 %v546
    %v548 = vand.u32 %v543, 4294901760
    %549 = vmatprep.subr.mxu0 %v548
    %v550 = vand.u32 %v542, 4294901760
    %551 = vmatpush1.xpose.msra.mxu0 %v550
    %552 = vmatprep.subr.mxu0 0.0
    %553 = vmatpush1.xpose.msra.mxu0 0.0
    %554 = vmatprep.subr.mxu0 0.0
    %555 = vmatpush1.xpose.msra.mxu0 0.0
    %556 = vmatprep.subr.mxu0 0.0
    %557 = vmatpush1.xpose.msra.mxu0 0.0
    %558 = vmatprep.subr.mxu0 0.0
    %559 = vmatpush1.xpose.msra.mxu0 0.0
    %560 = vmatprep.subr.mxu0 0.0
    %561 = vmatpush1.xpose.msra.mxu0 0.0
    %562 = vmatprep.subr.mxu0 0.0
    %563 = vmatpush1.xpose.msra.mxu0 0.0
    %564 = vmatprep.subr.mxu0 0.0
    %565 = vmatpush1.xpose.msra.mxu0 0.0
    %566 = vmatprep.subr.mxu0 0.0
    %567 = vmatpush1.xpose.msra.mxu0 0.0
    %568 = vmatprep.subr.mxu0 0.0
    %569 = vmatpush1.xpose.msra.mxu0 0.0
    %570 = vmatprep.subr.mxu0 0.0
    %571 = vmatpush1.xpose.msra.mxu0 0.0
    %572 = vmatprep.subr.mxu0 0.0
    %573 = vmatpush1.xpose.msra.mxu0 0.0
    %574 = vmatprep.subr.mxu0 0.0
    %575 = vmatpush1.xpose.msra.mxu0 0.0
    %576 = vmatprep.subr.mxu0 0.0
    %577 = vmatpush1.xpose.msra.mxu0 0.0
    %578 = vmatprep.subr.mxu0 0.0
    %579 = vmatpush1.xpose.msra.mxu0 0.0
    %580 = vmatprep.subr.mxu0 0.0
    %581 = vmatpush1.xpose.msra.mxu0 0.0
    %582 = vmatprep.subr.mxu0 0.0
    %583 = vmatpush1.xpose.msra.mxu0 0.0
    %584 = vmatprep.subr.mxu0 0.0
    %585 = vmatpush1.xpose.msra.mxu0 0.0
    %586 = vmatprep.subr.mxu0 0.0
    %587 = vmatpush1.xpose.msra.mxu0 0.0
    %588 = vmatprep.subr.mxu0 0.0
    %589 = vmatpush1.xpose.msra.mxu0 0.0
    %590 = vmatprep.subr.mxu0 0.0
    %591 = vmatpush1.xpose.msra.mxu0 0.0
    %592 = vmatprep.subr.mxu0 0.0
    %593 = vmatpush1.xpose.msra.mxu0 0.0
    %594 = vmatprep.subr.mxu0 0.0
    %595 = vmatpush1.xpose.msra.mxu0 0.0
    %596 = vmatprep.subr.mxu0 0.0
    %597 = vmatpush1.xpose.msra.mxu0 0.0
    %598 = vmatprep.subr.mxu0 0.0
    %599 = vmatpush1.xpose.msra.mxu0 0.0
    %600 = vmatprep.subr.mxu0 0.0
    %601 = vmatpush1.xpose.msra.mxu0 0.0
    %602 = vmatprep.subr.mxu0 0.0
    %603 = vmatpush1.xpose.msra.mxu0 0.0
    %604 = vmatprep.subr.mxu0 0.0
    %605 = vmatpush1.xpose.msra.mxu0 0.0
    %606 = vmatprep.subr.mxu0 0.0
    %607 = vmatpush1.xpose.msra.mxu0 0.0
    %608 = vmatprep.subr.mxu0 0.0
    %609 = vmatpush1.xpose.msra.mxu0 0.0
    %610 = vmatprep.subr.mxu0 0.0
    %611 = vmatpush1.xpose.msra.mxu0 0.0
    %612 = vmatprep.mubr.f32.mxu0 0.0
    %613 = vmatmul.mubr.f32.gmra.mrb[0].mxu0 0.0
    %v614 = vpop.f32.mrb[0].mxu0
    %v615 = vadd.f32 0.0, %v614
    %v616 = vpop.f32.mrb[0].mxu0
    %617 = vdwg.mxu0
    %v618 = vand.u32 %v541, 4294901760
    %v619 = vsub.f32 %v541, %v618
    %v620 = vand.u32 %v619, 4294901760
    %v621 = vsub.f32 %v619, %v620
    %v622 = vand.u32 %v621, 4294901760
    %623 = vmatprep.subr.mxu0 %v622
    %v624 = vand.u32 %v540, 4294901760
    %v625 = vsub.f32 %v540, %v624
    %v626 = vand.u32 %v625, 4294901760
    %v627 = vsub.f32 %v625, %v626
    %v628 = vand.u32 %v627, 4294901760
    %629 = vmatpush1.xpose.msra.mxu0 %v628
    %v630 = vand.u32 %v543, 4294901760
    %v631 = vsub.f32 %v543, %v630
    %v632 = vand.u32 %v631, 4294901760
    %v633 = vsub.f32 %v631, %v632
    %v634 = vand.u32 %v633, 4294901760
    %635 = vmatprep.subr.mxu0 %v634
    %v636 = vand.u32 %v542, 4294901760
    %v637 = vsub.f32 %v542, %v636
    %v638 = vand.u32 %v637, 4294901760
    %v639 = vsub.f32 %v637, %v638
    %v640 = vand.u32 %v639, 4294901760
    %641 = vmatpush1.xpose.msra.mxu0 %v640
    %642 = vmatprep.subr.mxu0 0.0
    %643 = vmatpush1.xpose.msra.mxu0 0.0
    %644 = vmatprep.subr.mxu0 0.0
    %645 = vmatpush1.xpose.msra.mxu0 0.0
    %646 = vmatprep.subr.mxu0 0.0
    %647 = vmatpush1.xpose.msra.mxu0 0.0
    %648 = vmatprep.subr.mxu0 0.0
    %649 = vmatpush1.xpose.msra.mxu0 0.0
    %650 = vmatprep.subr.mxu0 0.0
    %651 = vmatpush1.xpose.msra.mxu0 0.0
    %652 = vmatprep.subr.mxu0 0.0
    %653 = vmatpush1.xpose.msra.mxu0 0.0
    %654 = vmatprep.subr.mxu0 0.0
    %655 = vmatpush1.xpose.msra.mxu0 0.0
    %656 = vmatprep.subr.mxu0 0.0
    %657 = vmatpush1.xpose.msra.mxu0 0.0
    %658 = vmatprep.subr.mxu0 0.0
    %659 = vmatpush1.xpose.msra.mxu0 0.0
    %660 = vmatprep.subr.mxu0 0.0
    %661 = vmatpush1.xpose.msra.mxu0 0.0
    %662 = vmatprep.subr.mxu0 0.0
    %663 = vmatpush1.xpose.msra.mxu0 0.0
    %664 = vmatprep.subr.mxu0 0.0
    %665 = vmatpush1.xpose.msra.mxu0 0.0
    %666 = vmatprep.subr.mxu0 0.0
    %667 = vmatpush1.xpose.msra.mxu0 0.0
    %668 = vmatprep.subr.mxu0 0.0
    %669 = vmatpush1.xpose.msra.mxu0 0.0
    %670 = vmatprep.subr.mxu0 0.0
    %671 = vmatpush1.xpose.msra.mxu0 0.0
    %672 = vmatprep.subr.mxu0 0.0
    %673 = vmatpush1.xpose.msra.mxu0 0.0
    %674 = vmatprep.subr.mxu0 0.0
    %675 = vmatpush1.xpose.msra.mxu0 0.0
    %676 = vmatprep.subr.mxu0 0.0
    %677 = vmatpush1.xpose.msra.mxu0 0.0
    %678 = vmatprep.subr.mxu0 0.0
    %679 = vmatpush1.xpose.msra.mxu0 0.0
    %680 = vmatprep.subr.mxu0 0.0
    %681 = vmatpush1.xpose.msra.mxu0 0.0
    %682 = vmatprep.subr.mxu0 0.0
    %683 = vmatpush1.xpose.msra.mxu0 0.0
    %684 = vmatprep.subr.mxu0 0.0
    %685 = vmatpush1.xpose.msra.mxu0 0.0
    %686 = vmatprep.subr.mxu0 0.0
    %687 = vmatpush1.xpose.msra.mxu0 0.0
    %688 = vmatprep.subr.mxu0 0.0
    %689 = vmatpush1.xpose.msra.mxu0 0.0
    %690 = vmatprep.subr.mxu0 0.0
    %691 = vmatpush1.xpose.msra.mxu0 0.0
    %692 = vmatprep.subr.mxu0 0.0
    %693 = vmatpush1.xpose.msra.mxu0 0.0
    %694 = vmatprep.subr.mxu0 0.0
    %695 = vmatpush1.xpose.msra.mxu0 0.0
    %696 = vmatprep.subr.mxu0 0.0
    %697 = vmatpush1.xpose.msra.mxu0 0.0
    %698 = vmatprep.subr.mxu0 0.0
    %699 = vmatpush1.xpose.msra.mxu0 0.0
    %700 = vmatprep.subr.mxu0 0.0
    %701 = vmatpush1.xpose.msra.mxu0 0.0
    %702 = vmatprep.mubr.f32.mxu0 1.0
    %703 = vmatmul.mubr.f32.gmra.mrb[0].mxu0 1.0
    %v704 = vpop.f32.mrb[0].mxu0
    %v705 = vadd.f32 %v615, %v704
    %v706 = vpop.f32.mrb[0].mxu0
    %707 = vdwg.mxu0
    %v708 = vand.u32 %v541, 4294901760
    %v709 = vsub.f32 %v541, %v708
    %710 = vmatprep.subr.mxu0 %v709
    %v711 = vand.u32 %v540, 4294901760
    %v712 = vsub.f32 %v540, %v711
    %713 = vmatpush1.xpose.msra.mxu0 %v712
    %v714 = vand.u32 %v543, 4294901760
    %v715 = vsub.f32 %v543, %v714
    %716 = vmatprep.subr.mxu0 %v715
    %v717 = vand.u32 %v542, 4294901760
    %v718 = vsub.f32 %v542, %v717
    %719 = vmatpush1.xpose.msra.mxu0 %v718
    %720 = vmatprep.subr.mxu0 0.0
    %721 = vmatpush1.xpose.msra.mxu0 0.0
    %722 = vmatprep.subr.mxu0 0.0
    %723 = vmatpush1.xpose.msra.mxu0 0.0
    %724 = vmatprep.subr.mxu0 0.0
    %725 = vmatpush1.xpose.msra.mxu0 0.0
    %726 = vmatprep.subr.mxu0 0.0
    %727 = vmatpush1.xpose.msra.mxu0 0.0
    %728 = vmatprep.subr.mxu0 0.0
    %729 = vmatpush1.xpose.msra.mxu0 0.0
    %730 = vmatprep.subr.mxu0 0.0
    %731 = vmatpush1.xpose.msra.mxu0 0.0
    %732 = vmatprep.subr.mxu0 0.0
    %733 = vmatpush1.xpose.msra.mxu0 0.0
    %734 = vmatprep.subr.mxu0 0.0
    %735 = vmatpush1.xpose.msra.mxu0 0.0
    %736 = vmatprep.subr.mxu0 0.0
    %737 = vmatpush1.xpose.msra.mxu0 0.0
    %738 = vmatprep.subr.mxu0 0.0
    %739 = vmatpush1.xpose.msra.mxu0 0.0
    %740 = vmatprep.subr.mxu0 0.0
    %741 = vmatpush1.xpose.msra.mxu0 0.0
    %742 = vmatprep.subr.mxu0 0.0
    %743 = vmatpush1.xpose.msra.mxu0 0.0
    %744 = vmatprep.subr.mxu0 0.0
    %745 = vmatpush1.xpose.msra.mxu0 0.0
    %746 = vmatprep.subr.mxu0 0.0
    %747 = vmatpush1.xpose.msra.mxu0 0.0
    %748 = vmatprep.subr.mxu0 0.0
    %749 = vmatpush1.xpose.msra.mxu0 0.0
    %750 = vmatprep.subr.mxu0 0.0
    %751 = vmatpush1.xpose.msra.mxu0 0.0
    %752 = vmatprep.subr.mxu0 0.0
    %753 = vmatpush1.xpose.msra.mxu0 0.0
    %754 = vmatprep.subr.mxu0 0.0
    %755 = vmatpush1.xpose.msra.mxu0 0.0
    %756 = vmatprep.subr.mxu0 0.0
    %757 = vmatpush1.xpose.msra.mxu0 0.0
    %758 = vmatprep.subr.mxu0 0.0
    %759 = vmatpush1.xpose.msra.mxu0 0.0
    %760 = vmatprep.subr.mxu0 0.0
    %761 = vmatpush1.xpose.msra.mxu0 0.0
    %762 = vmatprep.subr.mxu0 0.0
    %763 = vmatpush1.xpose.msra.mxu0 0.0
    %764 = vmatprep.subr.mxu0 0.0
    %765 = vmatpush1.xpose.msra.mxu0 0.0
    %766 = vmatprep.subr.mxu0 0.0
    %767 = vmatpush1.xpose.msra.mxu0 0.0
    %768 = vmatprep.subr.mxu0 0.0
    %769 = vmatpush1.xpose.msra.mxu0 0.0
    %770 = vmatprep.subr.mxu0 0.0
    %771 = vmatpush1.xpose.msra.mxu0 0.0
    %772 = vmatprep.subr.mxu0 0.0
    %773 = vmatpush1.xpose.msra.mxu0 0.0
    %774 = vmatprep.subr.mxu0 0.0
    %775 = vmatpush1.xpose.msra.mxu0 0.0
    %776 = vmatprep.subr.mxu0 0.0
    %777 = vmatpush1.xpose.msra.mxu0 0.0
    %778 = vmatprep.subr.mxu0 0.0
    %779 = vmatpush1.xpose.msra.mxu0 0.0
    %780 = vmatprep.mubr.f32.mxu0 0.0
    %781 = vmatmul.mubr.f32.gmra.mrb[0].mxu0 0.0
    %v782 = vpop.f32.mrb[0].mxu0
    %v783 = vadd.f32 %v705, %v782
    %v784 = vpop.f32.mrb[0].mxu0
    %785 = vdwg.mxu0
    %v786 = vand.u32 %v541, 4294901760
    %787 = vmatprep.subr.mxu0 %v786
    %v788 = vand.u32 %v540, 4294901760
    %789 = vmatpush1.xpose.msra.mxu0 %v788
    %v790 = vand.u32 %v543, 4294901760
    %791 = vmatprep.subr.mxu0 %v790
    %v792 = vand.u32 %v542, 4294901760
    %793 = vmatpush1.xpose.msra.mxu0 %v792
    %794 = vmatprep.subr.mxu0 0.0
    %795 = vmatpush1.xpose.msra.mxu0 0.0
    %796 = vmatprep.subr.mxu0 0.0
    %797 = vmatpush1.xpose.msra.mxu0 0.0
    %798 = vmatprep.subr.mxu0 0.0
    %799 = vmatpush1.xpose.msra.mxu0 0.0
    %800 = vmatprep.subr.mxu0 0.0
    %801 = vmatpush1.xpose.msra.mxu0 0.0
    %802 = vmatprep.subr.mxu0 0.0
    %803 = vmatpush1.xpose.msra.mxu0 0.0
    %804 = vmatprep.subr.mxu0 0.0
    %805 = vmatpush1.xpose.msra.mxu0 0.0
    %806 = vmatprep.subr.mxu0 0.0
    %807 = vmatpush1.xpose.msra.mxu0 0.0
    %808 = vmatprep.subr.mxu0 0.0
    %809 = vmatpush1.xpose.msra.mxu0 0.0
    %810 = vmatprep.subr.mxu0 0.0
    %811 = vmatpush1.xpose.msra.mxu0 0.0
    %812 = vmatprep.subr.mxu0 0.0
    %813 = vmatpush1.xpose.msra.mxu0 0.0
    %814 = vmatprep.subr.mxu0 0.0
    %815 = vmatpush1.xpose.msra.mxu0 0.0
    %816 = vmatprep.subr.mxu0 0.0
    %817 = vmatpush1.xpose.msra.mxu0 0.0
    %818 = vmatprep.subr.mxu0 0.0
    %819 = vmatpush1.xpose.msra.mxu0 0.0
    %820 = vmatprep.subr.mxu0 0.0
    %821 = vmatpush1.xpose.msra.mxu0 0.0
    %822 = vmatprep.subr.mxu0 0.0
    %823 = vmatpush1.xpose.msra.mxu0 0.0
    %824 = vmatprep.subr.mxu0 0.0
    %825 = vmatpush1.xpose.msra.mxu0 0.0
    %826 = vmatprep.subr.mxu0 0.0
    %827 = vmatpush1.xpose.msra.mxu0 0.0
    %828 = vmatprep.subr.mxu0 0.0
    %829 = vmatpush1.xpose.msra.mxu0 0.0
    %830 = vmatprep.subr.mxu0 0.0
    %831 = vmatpush1.xpose.msra.mxu0 0.0
    %832 = vmatprep.subr.mxu0 0.0
    %833 = vmatpush1.xpose.msra.mxu0 0.0
    %834 = vmatprep.subr.mxu0 0.0
    %835 = vmatpush1.xpose.msra.mxu0 0.0
    %836 = vmatprep.subr.mxu0 0.0
    %837 = vmatpush1.xpose.msra.mxu0 0.0
    %838 = vmatprep.subr.mxu0 0.0
    %839 = vmatpush1.xpose.msra.mxu0 0.0
    %840 = vmatprep.subr.mxu0 0.0
    %841 = vmatpush1.xpose.msra.mxu0 0.0
    %842 = vmatprep.subr.mxu0 0.0
    %843 = vmatpush1.xpose.msra.mxu0 0.0
    %844 = vmatprep.subr.mxu0 0.0
    %845 = vmatpush1.xpose.msra.mxu0 0.0
    %846 = vmatprep.subr.mxu0 0.0
    %847 = vmatpush1.xpose.msra.mxu0 0.0
    %848 = vmatprep.subr.mxu0 0.0
    %849 = vmatpush1.xpose.msra.mxu0 0.0
    %850 = vmatprep.subr.mxu0 0.0
    %851 = vmatpush1.xpose.msra.mxu0 0.0
    %852 = vmatprep.subr.mxu0 0.0
    %853 = vmatpush1.xpose.msra.mxu0 0.0
    %854 = vmatprep.mubr.f32.mxu0 0.0
    %855 = vmatmul.mubr.f32.gmra.mrb[0].mxu0 0.0
    %v856 = vpop.f32.mrb[0].mxu0
    %v857 = vadd.f32 %v783, %v856
    %v858 = vpop.f32.mrb[0].mxu0
    %859 = vdwg.mxu0
    %v860 = vand.u32 %v541, 4294901760
    %v861 = vsub.f32 %v541, %v860
    %v862 = vand.u32 %v861, 4294901760
    %863 = vmatprep.subr.mxu0 %v862
    %v864 = vand.u32 %v540, 4294901760
    %v865 = vsub.f32 %v540, %v864
    %v866 = vand.u32 %v865, 4294901760
    %867 = vmatpush1.xpose.msra.mxu0 %v866
    %v868 = vand.u32 %v543, 4294901760
    %v869 = vsub.f32 %v543, %v868
    %v870 = vand.u32 %v869, 4294901760
    %871 = vmatprep.subr.mxu0 %v870
    %v872 = vand.u32 %v542, 4294901760
    %v873 = vsub.f32 %v542, %v872
    %v874 = vand.u32 %v873, 4294901760
    %875 = vmatpush1.xpose.msra.mxu0 %v874
    %876 = vmatprep.subr.mxu0 0.0
    %877 = vmatpush1.xpose.msra.mxu0 0.0
    %878 = vmatprep.subr.mxu0 0.0
    %879 = vmatpush1.xpose.msra.mxu0 0.0
    %880 = vmatprep.subr.mxu0 0.0
    %881 = vmatpush1.xpose.msra.mxu0 0.0
    %882 = vmatprep.subr.mxu0 0.0
    %883 = vmatpush1.xpose.msra.mxu0 0.0
    %884 = vmatprep.subr.mxu0 0.0
    %885 = vmatpush1.xpose.msra.mxu0 0.0
    %886 = vmatprep.subr.mxu0 0.0
    %887 = vmatpush1.xpose.msra.mxu0 0.0
    %888 = vmatprep.subr.mxu0 0.0
    %889 = vmatpush1.xpose.msra.mxu0 0.0
    %890 = vmatprep.subr.mxu0 0.0
    %891 = vmatpush1.xpose.msra.mxu0 0.0
    %892 = vmatprep.subr.mxu0 0.0
    %893 = vmatpush1.xpose.msra.mxu0 0.0
    %894 = vmatprep.subr.mxu0 0.0
    %895 = vmatpush1.xpose.msra.mxu0 0.0
    %896 = vmatprep.subr.mxu0 0.0
    %897 = vmatpush1.xpose.msra.mxu0 0.0
    %898 = vmatprep.subr.mxu0 0.0
    %899 = vmatpush1.xpose.msra.mxu0 0.0
    %900 = vmatprep.subr.mxu0 0.0
    %901 = vmatpush1.xpose.msra.mxu0 0.0
    %902 = vmatprep.subr.mxu0 0.0
    %903 = vmatpush1.xpose.msra.mxu0 0.0
    %904 = vmatprep.subr.mxu0 0.0
    %905 = vmatpush1.xpose.msra.mxu0 0.0
    %906 = vmatprep.subr.mxu0 0.0
    %907 = vmatpush1.xpose.msra.mxu0 0.0
    %908 = vmatprep.subr.mxu0 0.0
    %909 = vmatpush1.xpose.msra.mxu0 0.0
    %910 = vmatprep.subr.mxu0 0.0
    %911 = vmatpush1.xpose.msra.mxu0 0.0
    %912 = vmatprep.subr.mxu0 0.0
    %913 = vmatpush1.xpose.msra.mxu0 0.0
    %914 = vmatprep.subr.mxu0 0.0
    %915 = vmatpush1.xpose.msra.mxu0 0.0
    %916 = vmatprep.subr.mxu0 0.0
    %917 = vmatpush1.xpose.msra.mxu0 0.0
    %918 = vmatprep.subr.mxu0 0.0
    %919 = vmatpush1.xpose.msra.mxu0 0.0
    %920 = vmatprep.subr.mxu0 0.0
    %921 = vmatpush1.xpose.msra.mxu0 0.0
    %922 = vmatprep.subr.mxu0 0.0
    %923 = vmatpush1.xpose.msra.mxu0 0.0
    %924 = vmatprep.subr.mxu0 0.0
    %925 = vmatpush1.xpose.msra.mxu0 0.0
    %926 = vmatprep.subr.mxu0 0.0
    %927 = vmatpush1.xpose.msra.mxu0 0.0
    %928 = vmatprep.subr.mxu0 0.0
    %929 = vmatpush1.xpose.msra.mxu0 0.0
    %930 = vmatprep.subr.mxu0 0.0
    %931 = vmatpush1.xpose.msra.mxu0 0.0
    %932 = vmatprep.subr.mxu0 0.0
    %933 = vmatpush1.xpose.msra.mxu0 0.0
    %934 = vmatprep.subr.mxu0 0.0
    %935 = vmatpush1.xpose.msra.mxu0 0.0
    %936 = vmatprep.mubr.f32.mxu0 1.0
    %937 = vmatmul.mubr.f32.gmra.mrb[0].mxu0 1.0
    %v938 = vpop.f32.mrb[0].mxu0
    %v939 = vadd.f32 %v857, %v938
    %v940 = vpop.f32.mrb[0].mxu0
    %941 = vdwg.mxu0
    %v942 = vand.u32 %v541, 4294901760
    %943 = vmatprep.subr.mxu0 %v942
    %v944 = vand.u32 %v540, 4294901760
    %945 = vmatpush1.xpose.msra.mxu0 %v944
    %v946 = vand.u32 %v543, 4294901760
    %947 = vmatprep.subr.mxu0 %v946
    %v948 = vand.u32 %v542, 4294901760
    %949 = vmatpush1.xpose.msra.mxu0 %v948
    %950 = vmatprep.subr.mxu0 0.0
    %951 = vmatpush1.xpose.msra.mxu0 0.0
    %952 = vmatprep.subr.mxu0 0.0
    %953 = vmatpush1.xpose.msra.mxu0 0.0
    %954 = vmatprep.subr.mxu0 0.0
    %955 = vmatpush1.xpose.msra.mxu0 0.0
    %956 = vmatprep.subr.mxu0 0.0
    %957 = vmatpush1.xpose.msra.mxu0 0.0
    %958 = vmatprep.subr.mxu0 0.0
    %959 = vmatpush1.xpose.msra.mxu0 0.0
    %960 = vmatprep.subr.mxu0 0.0
    %961 = vmatpush1.xpose.msra.mxu0 0.0
    %962 = vmatprep.subr.mxu0 0.0
    %963 = vmatpush1.xpose.msra.mxu0 0.0
    %964 = vmatprep.subr.mxu0 0.0
    %965 = vmatpush1.xpose.msra.mxu0 0.0
    %966 = vmatprep.subr.mxu0 0.0
    %967 = vmatpush1.xpose.msra.mxu0 0.0
    %968 = vmatprep.subr.mxu0 0.0
    %969 = vmatpush1.xpose.msra.mxu0 0.0
    %970 = vmatprep.subr.mxu0 0.0
    %971 = vmatpush1.xpose.msra.mxu0 0.0
    %972 = vmatprep.subr.mxu0 0.0
    %973 = vmatpush1.xpose.msra.mxu0 0.0
    %974 = vmatprep.subr.mxu0 0.0
    %975 = vmatpush1.xpose.msra.mxu0 0.0
    %976 = vmatprep.subr.mxu0 0.0
    %977 = vmatpush1.xpose.msra.mxu0 0.0
    %978 = vmatprep.subr.mxu0 0.0
    %979 = vmatpush1.xpose.msra.mxu0 0.0
    %980 = vmatprep.subr.mxu0 0.0
    %981 = vmatpush1.xpose.msra.mxu0 0.0
    %982 = vmatprep.subr.mxu0 0.0
    %983 = vmatpush1.xpose.msra.mxu0 0.0
    %984 = vmatprep.subr.mxu0 0.0
    %985 = vmatpush1.xpose.msra.mxu0 0.0
    %986 = vmatprep.subr.mxu0 0.0
    %987 = vmatpush1.xpose.msra.mxu0 0.0
    %988 = vmatprep.subr.mxu0 0.0
    %989 = vmatpush1.xpose.msra.mxu0 0.0
    %990 = vmatprep.subr.mxu0 0.0
    %991 = vmatpush1.xpose.msra.mxu0 0.0
    %992 = vmatprep.subr.mxu0 0.0
    %993 = vmatpush1.xpose.msra.mxu0 0.0
    %994 = vmatprep.subr.mxu0 0.0
    %995 = vmatpush1.xpose.msra.mxu0 0.0
    %996 = vmatprep.subr.mxu0 0.0
    %997 = vmatpush1.xpose.msra.mxu0 0.0
    %998 = vmatprep.subr.mxu0 0.0
    %999 = vmatpush1.xpose.msra.mxu0 0.0
    %1000 = vmatprep.subr.mxu0 0.0
    %1001 = vmatpush1.xpose.msra.mxu0 0.0
    %1002 = vmatprep.subr.mxu0 0.0
    %1003 = vmatpush1.xpose.msra.mxu0 0.0
    %1004 = vmatprep.subr.mxu0 0.0
    %1005 = vmatpush1.xpose.msra.mxu0 0.0
    %1006 = vmatprep.subr.mxu0 0.0
    %1007 = vmatpush1.xpose.msra.mxu0 0.0
    %1008 = vmatprep.subr.mxu0 0.0
    %1009 = vmatpush1.xpose.msra.mxu0 0.0
    %1010 = vmatprep.mubr.f32.mxu0 1.0
    %1011 = vmatmul.mubr.f32.gmra.mrb[0].mxu0 1.0
    %v1012 = vpop.f32.mrb[0].mxu0
    %v1013 = vadd.f32 %v939, %v1012
    %v1014 = vpop.f32.mrb[0].mxu0
    %1015 = vdwg.mxu0
    %v1016 = vrsqrt.pop %v1013
    %v1017 = vmul.f32 %v1013, %v1016
    %vm1018 = vcmp.eq.f32.partialorder %v1013, inf
    %v1019 = vsel %vm1018, %v1013, %v1017
    %vm1020 = vcmp.eq.f32.partialorder %v1013, 0.0
    %v1021 = vand.u32 %v1013, 2147483648
    %v1022 = vsel %vm1020, %v1021, %v1019
    %v1023 = vmax.f32 %v1022, 1e-12
    %v1024 = vrcp.pop %v1023
    %v1025 = vmul.f32 %v537, %v1024
    %vm1026 = vcmask 122880
    %1027 = vst.msk [vmem:[#allocation5] sm:$0x1] %vm1026, %v1025
    // Predicated region
    $region14: #{tpu_custom_call.1} parent=1 // pred_check
      _
    $region15: #{tpu_custom_call.1} parent=1 // pred_check_branch
      %1029 = sbr.rel (0) target = $region17
    $region16: #{tpu_custom_call.1} parent=1 // pred_region
      %s1031 = ssub.s32 16, 16
      %1032 = vsyncadd [#allocation4], %s1031
      %s1034 = sshll.u32 [#allocation5], 4
      %s1035 = int_to_ptr.vmem [resolvable:$true] %s1034
      %1037 = dma.vmem_to_hbm [thread:$0]  %s1035, 16, %s2, [#allocation4]
    $region17: #{tpu_custom_call.1} parent=1 // pred_fallthru
      _
    // Predicated region
    $region18: #{tpu_custom_call.1} parent=1 // pred_check
      _
    $region19: #{tpu_custom_call.1} parent=1 // pred_check_branch
      %1039 = sbr.rel (0) target = $region21
    $region20: #{tpu_custom_call.1} parent=1 // pred_region
      %1040 = dma.done [#allocation4], 16
    $region21: #{tpu_custom_call.1} parent=1 // pred_fallthru
      _
    %1041 = vsyncpa [#allocation3], 1
    %1042 = vsyncpa [#allocation4], 1

</llo_original>
